<compile_context>
chip_gen: v5e
topology: v5e:2x2
jax: 0.10.0
libtpu: 0.0.40
codegen_flags: <defaults>
</compile_context>

<pallas_src>
import jax
import jax.numpy as jnp
from jax.experimental import pallas as pl
from jax.experimental.pallas import tpu as pltpu


# ----------------------------- kernel ---------------------------------------


def _movielens_kernel(uid_ref, mid_ref, uemb_ref, mx_ref, wt_ref, b_ref,
                      memb_ref, user_out_ref, movie_out_ref):
    # uid_ref:  (Nu,)     int32  SMEM   user node ids
    # mid_ref:  (Nm,)     int32  SMEM   movie node ids
    # uemb_ref: (Vu,1,D)  f32    VMEM   user embedding table (row-per-slab)
    # mx_ref:   (Nm,F)    f32    VMEM   movie genre features
    # wt_ref:   (F,D)     f32    VMEM   Linear weight, pre-transposed
    # b_ref:    (1,D)     f32    VMEM   Linear bias
    # memb_ref: (Vm,1,D)  f32    VMEM   movie embedding table (row-per-slab)
    nu = user_out_ref.shape[0]
    nm = movie_out_ref.shape[0]

    # ---- user branch: direct row gather (bit-exact, no MXU involved) ----
    for i in range(nu):                                   # static trip count
        user_out_ref[pl.ds(i, 1), :] = uemb_ref[uid_ref[i]]        # (1, D)

    # ---- movie branch: Linear(F->D) with pre-transposed W, fused bias ----
    lin = jnp.dot(mx_ref[...], wt_ref[...],
                  preferred_element_type=jnp.float32)               # (Nm, D)
    movie_out_ref[...] = (lin + b_ref[...]).astype(movie_out_ref.dtype)

    # ---- movie branch: add gathered embedding rows ----
    for i in range(nm):
        movie_out_ref[pl.ds(i, 1), :] = (
            movie_out_ref[pl.ds(i, 1), :] + memb_ref[mid_ref[i]])


# ----------------------------- wrapper ---------------------------------------


def _padded_vmem_bytes(shape, itemsize):
    """Bytes of one (8,128)-tile-padded VMEM buffer for `shape`."""
    shape = tuple(int(s) for s in shape)
    if len(shape) == 1:
        shape = (1, shape[0])
    lead = 1
    for s in shape[:-2]:
        lead *= s
    sub = -(-shape[-2] // 8) * 8
    lane = -(-shape[-1] // 128) * 128
    return lead * sub * lane * itemsize


def movielens_embedding_forward(params, data):
    """Equivalent of MovieLensEmbedding.forward, one fused Pallas kernel.

    data = {"user": {"node_id": (Nu,) int32},
            "movie": {"x": (Nm, 20) f32, "node_id": (Nm,) int32}}
    """
    user_emb = params["user_emb"].astype(jnp.float32)      # (Vu, D)
    movie_emb = params["movie_emb"].astype(jnp.float32)    # (Vm, D)
    vu, d = user_emb.shape
    vm = movie_emb.shape[0]

    user_ids = data["user"]["node_id"].astype(jnp.int32)
    movie_ids = data["movie"]["node_id"].astype(jnp.int32)
    x = data["movie"]["x"].astype(jnp.float32)
    nu = user_ids.shape[0]
    nm = movie_ids.shape[0]

    # nn.Embedding raises on OOB ids; VMEM reads have no bounds check, so
    # clamp untrusted ids instead of reading arbitrary memory.
    user_ids = jnp.clip(user_ids, 0, vu - 1)
    movie_ids = jnp.clip(movie_ids, 0, vm - 1)

    # Tables as (V, 1, D): gather index on a leading, untiled axis.
    uemb = user_emb.reshape(vu, 1, d)
    memb = movie_emb.reshape(vm, 1, d)

    # One-time layout change: torch stores W as (out, in); pass (in, out).
    w_t = jnp.transpose(params["movie_lin_w"]).astype(jnp.float32)  # (F, D)
    b = params["movie_lin_b"].astype(jnp.float32).reshape(1, d)     # (1, D)

    # VMEM cap from the actual padded footprint (+ double-buffer headroom).
    vmem_arrays = (uemb, x, w_t, b, memb)
    footprint = sum(_padded_vmem_bytes(a.shape, a.dtype.itemsize)
                    for a in vmem_arrays)
    footprint += _padded_vmem_bytes((nu, d), 4) + _padded_vmem_bytes((nm, d), 4)
    vmem_limit = 2 * footprint + (256 << 10)

    smem_spec = lambda: pl.BlockSpec(memory_space=pltpu.MemorySpace.SMEM)
    vmem_spec = lambda: pl.BlockSpec(memory_space=pltpu.MemorySpace.VMEM)

    user_out, movie_out = pl.pallas_call(
        _movielens_kernel,
        out_shape=(jax.ShapeDtypeStruct((nu, d), jnp.float32),
                   jax.ShapeDtypeStruct((nm, d), jnp.float32)),
        in_specs=[smem_spec(), smem_spec(),
                  vmem_spec(), vmem_spec(), vmem_spec(), vmem_spec(),
                  vmem_spec()],
        out_specs=(vmem_spec(), vmem_spec()),
        compiler_params=pltpu.CompilerParams(vmem_limit_bytes=int(vmem_limit)),
    )(user_ids, movie_ids, uemb, x, w_t, b, memb)

    return {"user": user_out, "movie": movie_out}


# ------------------------------- main ----------------------------------------


if __name__ == "__main__":
    key = jax.random.PRNGKey(0)
    ks = jax.random.split(key, 7)

    USER_INPUT_DIM = 64     # number of unique users
    MOVIE_INPUT_DIM = 96    # number of unique movies
    OUT_DIM = 32            # shared latent dim
    GENRE_DIM = 20          # fixed by nn.Linear(20, out_dim)
    N_USERS = 8             # users in this batch/graph
    N_MOVIES = 8            # movies in this batch/graph

    # Deterministic parameter init (shapes match the torch module).
    bound = 1.0 / (GENRE_DIM ** 0.5)
    params = {
        "user_emb": jax.random.normal(ks[0], (USER_INPUT_DIM, OUT_DIM), jnp.float32),
        "movie_emb": jax.random.normal(ks[1], (MOVIE_INPUT_DIM, OUT_DIM), jnp.float32),
        "movie_lin_w": jax.random.uniform(ks[2], (OUT_DIM, GENRE_DIM),
                                          jnp.float32, -bound, bound),
        "movie_lin_b": jax.random.uniform(ks[3], (OUT_DIM,),
                                          jnp.float32, -bound, bound),
    }

    data = {
        "user": {
            "node_id": jax.random.randint(ks[4], (N_USERS,), 0,
                                          USER_INPUT_DIM, jnp.int32),
        },
        "movie": {
            "x": jax.random.normal(ks[5], (N_MOVIES, GENRE_DIM), jnp.float32),
            "node_id": jax.random.randint(ks[6], (N_MOVIES,), 0,
                                          MOVIE_INPUT_DIM, jnp.int32),
        },
    }

    out = movielens_embedding_forward(params, data)
    out = jax.tree_util.tree_map(jax.block_until_ready, out)

    # Pure-JAX reference check.
    ref_user = params["user_emb"][data["user"]["node_id"]]
    ref_movie = (data["movie"]["x"] @ params["movie_lin_w"].T
                 + params["movie_lin_b"]
                 + params["movie_emb"][data["movie"]["node_id"]])

    assert out["user"].shape == (N_USERS, OUT_DIM)
    assert out["movie"].shape == (N_MOVIES, OUT_DIM)
    # Gathers are now exact row loads; only the f32 Linear goes through the MXU.
    assert jnp.allclose(out["user"], ref_user, atol=1e-5, rtol=1e-5)
    assert jnp.allclose(out["movie"], ref_movie, atol=1e-5, rtol=1e-5)

    print("KERNEL_OK")
</pallas_src>

<mosaic_0001>
module attributes {stable_mosaic.version = 11 : i64} {
  func.func @_movielens_kernel(%arg0: memref<8xi32, #tpu.memory_space<smem>>, %arg1: memref<8xi32, #tpu.memory_space<smem>>, %arg2: memref<64x1x32xf32, #tpu.memory_space<vmem>>, %arg3: memref<8x20xf32, #tpu.memory_space<vmem>>, %arg4: memref<20x32xf32, #tpu.memory_space<vmem>>, %arg5: memref<1x32xf32, #tpu.memory_space<vmem>>, %arg6: memref<96x1x32xf32, #tpu.memory_space<vmem>>, %arg7: memref<8x32xf32, #tpu.memory_space<vmem>>, %arg8: memref<8x32xf32, #tpu.memory_space<vmem>>) attributes {dimension_semantics = [], scalar_prefetch = 0 : i64, scratch_operands = 0 : i64, tpu.core_type = #tpu.core_type<tc>} {
    %c0 = arith.constant 0 : index
    %0 = memref.load %arg0[%c0] : memref<8xi32, #tpu.memory_space<smem>>
    %1 = arith.index_cast %0 : i32 to index
    %c0_0 = arith.constant 0 : index
    %c0_1 = arith.constant 0 : index
    %2 = vector.load %arg2[%1, %c0_0, %c0_1] : memref<64x1x32xf32, #tpu.memory_space<vmem>>, vector<1x1x32xf32>
    %3 = vector.shape_cast %2 : vector<1x1x32xf32> to vector<1x32xf32>
    %c0_2 = arith.constant 0 : index
    %c0_3 = arith.constant 0 : index
    %4 = vector.load %arg7[%c0_2, %c0_3] : memref<8x32xf32, #tpu.memory_space<vmem>>, vector<1x32xf32>
    tpu.vector_store %arg7[%c0_2, %c0_3], %3 {strides = array<i32>} : memref<8x32xf32, #tpu.memory_space<vmem>>, vector<1x32xf32>,
    %c1 = arith.constant 1 : index
    %5 = memref.load %arg0[%c1] : memref<8xi32, #tpu.memory_space<smem>>
    %6 = arith.index_cast %5 : i32 to index
    %c0_4 = arith.constant 0 : index
    %c0_5 = arith.constant 0 : index
    %7 = vector.load %arg2[%6, %c0_4, %c0_5] : memref<64x1x32xf32, #tpu.memory_space<vmem>>, vector<1x1x32xf32>
    %8 = vector.shape_cast %7 : vector<1x1x32xf32> to vector<1x32xf32>
    %c1_6 = arith.constant 1 : index
    %c0_7 = arith.constant 0 : index
    %9 = vector.load %arg7[%c1_6, %c0_7] : memref<8x32xf32, #tpu.memory_space<vmem>>, vector<1x32xf32>
    tpu.vector_store %arg7[%c1_6, %c0_7], %8 {strides = array<i32>} : memref<8x32xf32, #tpu.memory_space<vmem>>, vector<1x32xf32>,
    %c2 = arith.constant 2 : index
    %10 = memref.load %arg0[%c2] : memref<8xi32, #tpu.memory_space<smem>>
    %11 = arith.index_cast %10 : i32 to index
    %c0_8 = arith.constant 0 : index
    %c0_9 = arith.constant 0 : index
    %12 = vector.load %arg2[%11, %c0_8, %c0_9] : memref<64x1x32xf32, #tpu.memory_space<vmem>>, vector<1x1x32xf32>
    %13 = vector.shape_cast %12 : vector<1x1x32xf32> to vector<1x32xf32>
    %c2_10 = arith.constant 2 : index
    %c0_11 = arith.constant 0 : index
    %14 = vector.load %arg7[%c2_10, %c0_11] : memref<8x32xf32, #tpu.memory_space<vmem>>, vector<1x32xf32>
    tpu.vector_store %arg7[%c2_10, %c0_11], %13 {strides = array<i32>} : memref<8x32xf32, #tpu.memory_space<vmem>>, vector<1x32xf32>,
    %c3 = arith.constant 3 : index
    %15 = memref.load %arg0[%c3] : memref<8xi32, #tpu.memory_space<smem>>
    %16 = arith.index_cast %15 : i32 to index
    %c0_12 = arith.constant 0 : index
    %c0_13 = arith.constant 0 : index
    %17 = vector.load %arg2[%16, %c0_12, %c0_13] : memref<64x1x32xf32, #tpu.memory_space<vmem>>, vector<1x1x32xf32>
    %18 = vector.shape_cast %17 : vector<1x1x32xf32> to vector<1x32xf32>
    %c3_14 = arith.constant 3 : index
    %c0_15 = arith.constant 0 : index
    %19 = vector.load %arg7[%c3_14, %c0_15] : memref<8x32xf32, #tpu.memory_space<vmem>>, vector<1x32xf32>
    tpu.vector_store %arg7[%c3_14, %c0_15], %18 {strides = array<i32>} : memref<8x32xf32, #tpu.memory_space<vmem>>, vector<1x32xf32>,
    %c4 = arith.constant 4 : index
    %20 = memref.load %arg0[%c4] : memref<8xi32, #tpu.memory_space<smem>>
    %21 = arith.index_cast %20 : i32 to index
    %c0_16 = arith.constant 0 : index
    %c0_17 = arith.constant 0 : index
    %22 = vector.load %arg2[%21, %c0_16, %c0_17] : memref<64x1x32xf32, #tpu.memory_space<vmem>>, vector<1x1x32xf32>
    %23 = vector.shape_cast %22 : vector<1x1x32xf32> to vector<1x32xf32>
    %c4_18 = arith.constant 4 : index
    %c0_19 = arith.constant 0 : index
    %24 = vector.load %arg7[%c4_18, %c0_19] : memref<8x32xf32, #tpu.memory_space<vmem>>, vector<1x32xf32>
    tpu.vector_store %arg7[%c4_18, %c0_19], %23 {strides = array<i32>} : memref<8x32xf32, #tpu.memory_space<vmem>>, vector<1x32xf32>,
    %c5 = arith.constant 5 : index
    %25 = memref.load %arg0[%c5] : memref<8xi32, #tpu.memory_space<smem>>
    %26 = arith.index_cast %25 : i32 to index
    %c0_20 = arith.constant 0 : index
    %c0_21 = arith.constant 0 : index
    %27 = vector.load %arg2[%26, %c0_20, %c0_21] : memref<64x1x32xf32, #tpu.memory_space<vmem>>, vector<1x1x32xf32>
    %28 = vector.shape_cast %27 : vector<1x1x32xf32> to vector<1x32xf32>
    %c5_22 = arith.constant 5 : index
    %c0_23 = arith.constant 0 : index
    %29 = vector.load %arg7[%c5_22, %c0_23] : memref<8x32xf32, #tpu.memory_space<vmem>>, vector<1x32xf32>
    tpu.vector_store %arg7[%c5_22, %c0_23], %28 {strides = array<i32>} : memref<8x32xf32, #tpu.memory_space<vmem>>, vector<1x32xf32>,
    %c6 = arith.constant 6 : index
    %30 = memref.load %arg0[%c6] : memref<8xi32, #tpu.memory_space<smem>>
    %31 = arith.index_cast %30 : i32 to index
    %c0_24 = arith.constant 0 : index
    %c0_25 = arith.constant 0 : index
    %32 = vector.load %arg2[%31, %c0_24, %c0_25] : memref<64x1x32xf32, #tpu.memory_space<vmem>>, vector<1x1x32xf32>
    %33 = vector.shape_cast %32 : vector<1x1x32xf32> to vector<1x32xf32>
    %c6_26 = arith.constant 6 : index
    %c0_27 = arith.constant 0 : index
    %34 = vector.load %arg7[%c6_26, %c0_27] : memref<8x32xf32, #tpu.memory_space<vmem>>, vector<1x32xf32>
    tpu.vector_store %arg7[%c6_26, %c0_27], %33 {strides = array<i32>} : memref<8x32xf32, #tpu.memory_space<vmem>>, vector<1x32xf32>,
    %c7 = arith.constant 7 : index
    %35 = memref.load %arg0[%c7] : memref<8xi32, #tpu.memory_space<smem>>
    %36 = arith.index_cast %35 : i32 to index
    %c0_28 = arith.constant 0 : index
    %c0_29 = arith.constant 0 : index
    %37 = vector.load %arg2[%36, %c0_28, %c0_29] : memref<64x1x32xf32, #tpu.memory_space<vmem>>, vector<1x1x32xf32>
    %38 = vector.shape_cast %37 : vector<1x1x32xf32> to vector<1x32xf32>
    %c7_30 = arith.constant 7 : index
    %c0_31 = arith.constant 0 : index
    %39 = vector.load %arg7[%c7_30, %c0_31] : memref<8x32xf32, #tpu.memory_space<vmem>>, vector<1x32xf32>
    tpu.vector_store %arg7[%c7_30, %c0_31], %38 {strides = array<i32>} : memref<8x32xf32, #tpu.memory_space<vmem>>, vector<1x32xf32>,
    %c0_32 = arith.constant 0 : index
    %c0_33 = arith.constant 0 : index
    %40 = vector.load %arg3[%c0_32, %c0_33] : memref<8x20xf32, #tpu.memory_space<vmem>>, vector<8x20xf32>
    %c0_34 = arith.constant 0 : index
    %c0_35 = arith.constant 0 : index
    %41 = vector.load %arg4[%c0_34, %c0_35] : memref<20x32xf32, #tpu.memory_space<vmem>>, vector<20x32xf32>
    %cst = arith.constant dense<0.000000e+00> : vector<8x32xf32>
    %42 = tpu.matmul %40, %41, %cst {dimension_numbers = #tpu.dot_dimension_numbers<[1], [0], [0], [1], [0, 0, 1, 1], [], []>} : vector<8x20xf32>, vector<20x32xf32>, vector<8x32xf32> -> vector<8x32xf32>
    %c0_36 = arith.constant 0 : index
    %c0_37 = arith.constant 0 : index
    %43 = vector.load %arg5[%c0_36, %c0_37] : memref<1x32xf32, #tpu.memory_space<vmem>>, vector<1x32xf32>
    %44 = vector.broadcast %43 : vector<1x32xf32> to vector<8x32xf32>
    %45 = arith.addf %42, %44 : vector<8x32xf32>
    %c0_38 = arith.constant 0 : index
    %c0_39 = arith.constant 0 : index
    %46 = vector.load %arg8[%c0_38, %c0_39] : memref<8x32xf32, #tpu.memory_space<vmem>>, vector<8x32xf32>
    tpu.vector_store %arg8[%c0_38, %c0_39], %45 {strides = array<i32>} : memref<8x32xf32, #tpu.memory_space<vmem>>, vector<8x32xf32>,
    %c0_40 = arith.constant 0 : index
    %c0_41 = arith.constant 0 : index
    %47 = vector.load %arg8[%c0_40, %c0_41] : memref<8x32xf32, #tpu.memory_space<vmem>>, vector<1x32xf32>
    %c0_42 = arith.constant 0 : index
    %48 = memref.load %arg1[%c0_42] : memref<8xi32, #tpu.memory_space<smem>>
    %49 = arith.index_cast %48 : i32 to index
    %c0_43 = arith.constant 0 : index
    %c0_44 = arith.constant 0 : index
    %50 = vector.load %arg6[%49, %c0_43, %c0_44] : memref<96x1x32xf32, #tpu.memory_space<vmem>>, vector<1x1x32xf32>
    %51 = vector.shape_cast %50 : vector<1x1x32xf32> to vector<1x32xf32>
    %52 = arith.addf %47, %51 : vector<1x32xf32>
    %c0_45 = arith.constant 0 : index
    %c0_46 = arith.constant 0 : index
    %53 = vector.load %arg8[%c0_45, %c0_46] : memref<8x32xf32, #tpu.memory_space<vmem>>, vector<1x32xf32>
    tpu.vector_store %arg8[%c0_45, %c0_46], %52 {strides = array<i32>} : memref<8x32xf32, #tpu.memory_space<vmem>>, vector<1x32xf32>,
    %c1_47 = arith.constant 1 : index
    %c0_48 = arith.constant 0 : index
    %54 = vector.load %arg8[%c1_47, %c0_48] : memref<8x32xf32, #tpu.memory_space<vmem>>, vector<1x32xf32>
    %c1_49 = arith.constant 1 : index
    %55 = memref.load %arg1[%c1_49] : memref<8xi32, #tpu.memory_space<smem>>
    %56 = arith.index_cast %55 : i32 to index
    %c0_50 = arith.constant 0 : index
    %c0_51 = arith.constant 0 : index
    %57 = vector.load %arg6[%56, %c0_50, %c0_51] : memref<96x1x32xf32, #tpu.memory_space<vmem>>, vector<1x1x32xf32>
    %58 = vector.shape_cast %57 : vector<1x1x32xf32> to vector<1x32xf32>
    %59 = arith.addf %54, %58 : vector<1x32xf32>
    %c1_52 = arith.constant 1 : index
    %c0_53 = arith.constant 0 : index
    %60 = vector.load %arg8[%c1_52, %c0_53] : memref<8x32xf32, #tpu.memory_space<vmem>>, vector<1x32xf32>
    tpu.vector_store %arg8[%c1_52, %c0_53], %59 {strides = array<i32>} : memref<8x32xf32, #tpu.memory_space<vmem>>, vector<1x32xf32>,
    %c2_54 = arith.constant 2 : index
    %c0_55 = arith.constant 0 : index
    %61 = vector.load %arg8[%c2_54, %c0_55] : memref<8x32xf32, #tpu.memory_space<vmem>>, vector<1x32xf32>
    %c2_56 = arith.constant 2 : index
    %62 = memref.load %arg1[%c2_56] : memref<8xi32, #tpu.memory_space<smem>>
    %63 = arith.index_cast %62 : i32 to index
    %c0_57 = arith.constant 0 : index
    %c0_58 = arith.constant 0 : index
    %64 = vector.load %arg6[%63, %c0_57, %c0_58] : memref<96x1x32xf32, #tpu.memory_space<vmem>>, vector<1x1x32xf32>
    %65 = vector.shape_cast %64 : vector<1x1x32xf32> to vector<1x32xf32>
    %66 = arith.addf %61, %65 : vector<1x32xf32>
    %c2_59 = arith.constant 2 : index
    %c0_60 = arith.constant 0 : index
    %67 = vector.load %arg8[%c2_59, %c0_60] : memref<8x32xf32, #tpu.memory_space<vmem>>, vector<1x32xf32>
    tpu.vector_store %arg8[%c2_59, %c0_60], %66 {strides = array<i32>} : memref<8x32xf32, #tpu.memory_space<vmem>>, vector<1x32xf32>,
    %c3_61 = arith.constant 3 : index
    %c0_62 = arith.constant 0 : index
    %68 = vector.load %arg8[%c3_61, %c0_62] : memref<8x32xf32, #tpu.memory_space<vmem>>, vector<1x32xf32>
    %c3_63 = arith.constant 3 : index
    %69 = memref.load %arg1[%c3_63] : memref<8xi32, #tpu.memory_space<smem>>
    %70 = arith.index_cast %69 : i32 to index
    %c0_64 = arith.constant 0 : index
    %c0_65 = arith.constant 0 : index
    %71 = vector.load %arg6[%70, %c0_64, %c0_65] : memref<96x1x32xf32, #tpu.memory_space<vmem>>, vector<1x1x32xf32>
    %72 = vector.shape_cast %71 : vector<1x1x32xf32> to vector<1x32xf32>
    %73 = arith.addf %68, %72 : vector<1x32xf32>
    %c3_66 = arith.constant 3 : index
    %c0_67 = arith.constant 0 : index
    %74 = vector.load %arg8[%c3_66, %c0_67] : memref<8x32xf32, #tpu.memory_space<vmem>>, vector<1x32xf32>
    tpu.vector_store %arg8[%c3_66, %c0_67], %73 {strides = array<i32>} : memref<8x32xf32, #tpu.memory_space<vmem>>, vector<1x32xf32>,
    %c4_68 = arith.constant 4 : index
    %c0_69 = arith.constant 0 : index
    %75 = vector.load %arg8[%c4_68, %c0_69] : memref<8x32xf32, #tpu.memory_space<vmem>>, vector<1x32xf32>
    %c4_70 = arith.constant 4 : index
    %76 = memref.load %arg1[%c4_70] : memref<8xi32, #tpu.memory_space<smem>>
    %77 = arith.index_cast %76 : i32 to index
    %c0_71 = arith.constant 0 : index
    %c0_72 = arith.constant 0 : index
    %78 = vector.load %arg6[%77, %c0_71, %c0_72] : memref<96x1x32xf32, #tpu.memory_space<vmem>>, vector<1x1x32xf32>
    %79 = vector.shape_cast %78 : vector<1x1x32xf32> to vector<1x32xf32>
    %80 = arith.addf %75, %79 : vector<1x32xf32>
    %c4_73 = arith.constant 4 : index
    %c0_74 = arith.constant 0 : index
    %81 = vector.load %arg8[%c4_73, %c0_74] : memref<8x32xf32, #tpu.memory_space<vmem>>, vector<1x32xf32>
    tpu.vector_store %arg8[%c4_73, %c0_74], %80 {strides = array<i32>} : memref<8x32xf32, #tpu.memory_space<vmem>>, vector<1x32xf32>,
    %c5_75 = arith.constant 5 : index
    %c0_76 = arith.constant 0 : index
    %82 = vector.load %arg8[%c5_75, %c0_76] : memref<8x32xf32, #tpu.memory_space<vmem>>, vector<1x32xf32>
    %c5_77 = arith.constant 5 : index
    %83 = memref.load %arg1[%c5_77] : memref<8xi32, #tpu.memory_space<smem>>
    %84 = arith.index_cast %83 : i32 to index
    %c0_78 = arith.constant 0 : index
    %c0_79 = arith.constant 0 : index
    %85 = vector.load %arg6[%84, %c0_78, %c0_79] : memref<96x1x32xf32, #tpu.memory_space<vmem>>, vector<1x1x32xf32>
    %86 = vector.shape_cast %85 : vector<1x1x32xf32> to vector<1x32xf32>
    %87 = arith.addf %82, %86 : vector<1x32xf32>
    %c5_80 = arith.constant 5 : index
    %c0_81 = arith.constant 0 : index
    %88 = vector.load %arg8[%c5_80, %c0_81] : memref<8x32xf32, #tpu.memory_space<vmem>>, vector<1x32xf32>
    tpu.vector_store %arg8[%c5_80, %c0_81], %87 {strides = array<i32>} : memref<8x32xf32, #tpu.memory_space<vmem>>, vector<1x32xf32>,
    %c6_82 = arith.constant 6 : index
    %c0_83 = arith.constant 0 : index
    %89 = vector.load %arg8[%c6_82, %c0_83] : memref<8x32xf32, #tpu.memory_space<vmem>>, vector<1x32xf32>
    %c6_84 = arith.constant 6 : index
    %90 = memref.load %arg1[%c6_84] : memref<8xi32, #tpu.memory_space<smem>>
    %91 = arith.index_cast %90 : i32 to index
    %c0_85 = arith.constant 0 : index
    %c0_86 = arith.constant 0 : index
    %92 = vector.load %arg6[%91, %c0_85, %c0_86] : memref<96x1x32xf32, #tpu.memory_space<vmem>>, vector<1x1x32xf32>
    %93 = vector.shape_cast %92 : vector<1x1x32xf32> to vector<1x32xf32>
    %94 = arith.addf %89, %93 : vector<1x32xf32>
    %c6_87 = arith.constant 6 : index
    %c0_88 = arith.constant 0 : index
    %95 = vector.load %arg8[%c6_87, %c0_88] : memref<8x32xf32, #tpu.memory_space<vmem>>, vector<1x32xf32>
    tpu.vector_store %arg8[%c6_87, %c0_88], %94 {strides = array<i32>} : memref<8x32xf32, #tpu.memory_space<vmem>>, vector<1x32xf32>,
    %c7_89 = arith.constant 7 : index
    %c0_90 = arith.constant 0 : index
    %96 = vector.load %arg8[%c7_89, %c0_90] : memref<8x32xf32, #tpu.memory_space<vmem>>, vector<1x32xf32>
    %c7_91 = arith.constant 7 : index
    %97 = memref.load %arg1[%c7_91] : memref<8xi32, #tpu.memory_space<smem>>
    %98 = arith.index_cast %97 : i32 to index
    %c0_92 = arith.constant 0 : index
    %c0_93 = arith.constant 0 : index
    %99 = vector.load %arg6[%98, %c0_92, %c0_93] : memref<96x1x32xf32, #tpu.memory_space<vmem>>, vector<1x1x32xf32>
    %100 = vector.shape_cast %99 : vector<1x1x32xf32> to vector<1x32xf32>
    %101 = arith.addf %96, %100 : vector<1x32xf32>
    %c7_94 = arith.constant 7 : index
    %c0_95 = arith.constant 0 : index
    %102 = vector.load %arg8[%c7_94, %c0_95] : memref<8x32xf32, #tpu.memory_space<vmem>>, vector<1x32xf32>
    tpu.vector_store %arg8[%c7_94, %c0_95], %101 {strides = array<i32>} : memref<8x32xf32, #tpu.memory_space<vmem>>, vector<1x32xf32>,
    return
  }
}

</mosaic_0001>

<llo_original>
// kernel: tpu_custom_call.1
$region0: #{tpu_custom_call.1}
  #allocation0 [shape = 'u32[]', space=smem, size = 0x4, offset = 0x4, fixed_abs, tag = 'smem constant byte address 0x4 - core index']
  #allocation1 [shape = 'u32[72,128]{1,0:T(1,128)}', space=vmem, size = 0x9000, scoped, tag = 'internal scratch']
  %s0 = inlined_call_operand.vmem [shape: s32[8], index: 0, kind: input, shape index: {}]
  %s1 = inlined_call_operand.vmem [shape: s32[8], index: 1, kind: input, shape index: {}]
  %s2 = inlined_call_operand.vmem [shape: f32[64,1,32], index: 2, kind: input, shape index: {}]
  %s3 = inlined_call_operand.vmem [shape: f32[8,20], index: 3, kind: input, shape index: {}]
  %s4 = inlined_call_operand.vmem [shape: f32[20,32], index: 4, kind: input, shape index: {}]
  %s5 = inlined_call_operand.vmem [shape: f32[1,32], index: 5, kind: input, shape index: {}]
  %s6 = inlined_call_operand.vmem [shape: f32[96,1,32], index: 6, kind: input, shape index: {}]
  %s7 = inlined_call_operand.hbm [shape: f32[8,32], index: 7, kind: output, shape index: {0}]
  %s8 = inlined_call_operand.hbm [shape: f32[8,32], index: 8, kind: output, shape index: {1}]
  %9 = xla_tuple %s7, %s8
  %s10 = sld [smem:[#allocation0]]
  $region54: #{tpu_custom_call.1} parent=0
    _
  %s12 = ssub.s32 1, %s10
  %s13 = scalar_select 0, %s12, %s10
  $region1: #{tpu_custom_call.1} parent=0
    #allocation2 [shape = 'u8[512]{0}', space=smem, size = 0x200, scoped, tag = 'input window, operand 0, single buffered']
    #allocation3 [shape = 's32[1]{0}', space=sflag, size = 0x4, scoped, tag = 'scoped memory for tpu_custom_call.1']
    #allocation4 [shape = 's32[1]{0}', space=sflag, size = 0x4, scoped, tag = 'scoped memory for tpu_custom_call.1']
    #allocation5 [shape = 'u8[512]{0}', space=smem, size = 0x200, scoped, tag = 'input window, operand 1, single buffered']
    #allocation6 [shape = 's32[1]{0}', space=sflag, size = 0x4, scoped, tag = 'scoped memory for tpu_custom_call.1']
    #allocation7 [shape = 'u8[4096]{0}', space=vmem, size = 0x1000, scoped, tag = 'output window, operand 0, single buffered']
    #allocation8 [shape = 'u8[4096]{0}', space=vmem, size = 0x1000, scoped, tag = 'output window, operand 1, single buffered']
    #allocation9 [shape = 's32[1]{0}', space=sflag, size = 0x4, scoped, tag = 'scoped memory for tpu_custom_call.1']
    %14 = vsyncpa [#allocation4], 0
    %15 = vsyncpa [#allocation6], 0
    %16 = vsyncpa [#allocation3], 0
    %17 = vsyncpa [#allocation9], 0
    // Predicated region
    $region2: #{tpu_custom_call.1} parent=1 // pred_check
      _
    $region3: #{tpu_custom_call.1} parent=1 // pred_check_branch
      %19 = sbr.rel (0) target = $region5
    $region4: #{tpu_custom_call.1} parent=1 // pred_region
      %21 = vsyncadd [#allocation4], 0
      %s23 = sshll.u32 %s0, 4
      %s24 = int_to_ptr.vmem [resolvable:$true] %s23
      %26 = dma.vmem_to_smem %s24, 16, [#allocation2], [#allocation4]
    $region5: #{tpu_custom_call.1} parent=1 // pred_fallthru
      _
    // Predicated region
    $region6: #{tpu_custom_call.1} parent=1 // pred_check
      _
    $region7: #{tpu_custom_call.1} parent=1 // pred_check_branch
      %28 = sbr.rel (0) target = $region9
    $region8: #{tpu_custom_call.1} parent=1 // pred_region
      %30 = vsyncadd [#allocation6], 0
      %s32 = sshll.u32 %s1, 4
      %s33 = int_to_ptr.vmem [resolvable:$true] %s32
      %35 = dma.vmem_to_smem %s33, 16, [#allocation5], [#allocation6]
    $region9: #{tpu_custom_call.1} parent=1 // pred_fallthru
      _
    // Predicated region
    $region10: #{tpu_custom_call.1} parent=1 // pred_check
      _
    $region11: #{tpu_custom_call.1} parent=1 // pred_check_branch
      %37 = sbr.rel (0) target = $region13
    $region12: #{tpu_custom_call.1} parent=1 // pred_region
      _
    $region13: #{tpu_custom_call.1} parent=1 // pred_fallthru
      _
    // Predicated region
    $region14: #{tpu_custom_call.1} parent=1 // pred_check
      _
    $region15: #{tpu_custom_call.1} parent=1 // pred_check_branch
      %39 = sbr.rel (0) target = $region17
    $region16: #{tpu_custom_call.1} parent=1 // pred_region
      _
    $region17: #{tpu_custom_call.1} parent=1 // pred_fallthru
      _
    // Predicated region
    $region18: #{tpu_custom_call.1} parent=1 // pred_check
      _
    $region19: #{tpu_custom_call.1} parent=1 // pred_check_branch
      %41 = sbr.rel (0) target = $region21
    $region20: #{tpu_custom_call.1} parent=1 // pred_region
      _
    $region21: #{tpu_custom_call.1} parent=1 // pred_fallthru
      _
    // Predicated region
    $region22: #{tpu_custom_call.1} parent=1 // pred_check
      _
    $region23: #{tpu_custom_call.1} parent=1 // pred_check_branch
      %43 = sbr.rel (0) target = $region25
    $region24: #{tpu_custom_call.1} parent=1 // pred_region
      _
    $region25: #{tpu_custom_call.1} parent=1 // pred_fallthru
      _
    // Predicated region
    $region26: #{tpu_custom_call.1} parent=1 // pred_check
      _
    $region27: #{tpu_custom_call.1} parent=1 // pred_check_branch
      %45 = sbr.rel (0) target = $region29
    $region28: #{tpu_custom_call.1} parent=1 // pred_region
      _
    $region29: #{tpu_custom_call.1} parent=1 // pred_fallthru
      _
    // Predicated region
    $region30: #{tpu_custom_call.1} parent=1 // pred_check
      _
    $region31: #{tpu_custom_call.1} parent=1 // pred_check_branch
      %47 = sbr.rel (0) target = $region33
    $region32: #{tpu_custom_call.1} parent=1 // pred_region
      %49 = dma.done [#allocation4], 16
    $region33: #{tpu_custom_call.1} parent=1 // pred_fallthru
      _
    // Predicated region
    $region34: #{tpu_custom_call.1} parent=1 // pred_check
      _
    $region35: #{tpu_custom_call.1} parent=1 // pred_check_branch
      %51 = sbr.rel (0) target = $region37
    $region36: #{tpu_custom_call.1} parent=1 // pred_region
      %53 = dma.done [#allocation6], 16
    $region37: #{tpu_custom_call.1} parent=1 // pred_fallthru
      _
    %54 = sfence
    %s55 = sld [smem:[#allocation2]]
    %s56 = scalar_lea.vmem %s2, %s55
    %v57 = vld [vmem:[%s56] sm:$0x1]
    %vm58 = vcmask 253952
    %59 = vst.msk [vmem:[#allocation7] sm:$0x1] %vm58, %v57
    %s60 = sld [smem:[#allocation2 + $0x1]]
    %s61 = scalar_lea.vmem %s2, %s60
    %v62 = vld [vmem:[%s61] sm:$0x1]
    %63 = vst.msk [vmem:[#allocation7 + $0x1] sm:$0x1] %vm58, %v62
    %s64 = sld [smem:[#allocation2 + $0x2]]
    %s65 = scalar_lea.vmem %s2, %s64
    %v66 = vld [vmem:[%s65] sm:$0x1]
    %67 = vst.msk [vmem:[#allocation7 + $0x2] sm:$0x1] %vm58, %v66
    %s68 = sld [smem:[#allocation2 + $0x3]]
    %s69 = scalar_lea.vmem %s2, %s68
    %v70 = vld [vmem:[%s69] sm:$0x1]
    %71 = vst.msk [vmem:[#allocation7 + $0x3] sm:$0x1] %vm58, %v70
    %s72 = sld [smem:[#allocation2 + $0x4]]
    %s73 = scalar_lea.vmem %s2, %s72
    %v74 = vld [vmem:[%s73] sm:$0x1]
    %75 = vst.msk [vmem:[#allocation7 + $0x4] sm:$0x1] %vm58, %v74
    %s76 = sld [smem:[#allocation2 + $0x5]]
    %s77 = scalar_lea.vmem %s2, %s76
    %v78 = vld [vmem:[%s77] sm:$0x1]
    %79 = vst.msk [vmem:[#allocation7 + $0x5] sm:$0x1] %vm58, %v78
    %s80 = sld [smem:[#allocation2 + $0x6]]
    %s81 = scalar_lea.vmem %s2, %s80
    %v82 = vld [vmem:[%s81] sm:$0x1]
    %83 = vst.msk [vmem:[#allocation7 + $0x6] sm:$0x1] %vm58, %v82
    %s84 = sld [smem:[#allocation2 + $0x7]]
    %s85 = scalar_lea.vmem %s2, %s84
    %v86 = vld [vmem:[%s85] sm:$0x1]
    %87 = vst.msk [vmem:[#allocation7 + $0x7] sm:$0x1] %vm58, %v86
    %v88 = vld [vmem:[%s3] sm:$0xff]
    %v89 = vld [vmem:[%s4] sm:$0xff]
    %v90 = vld [vmem:[%s4 + $0x8] sm:$0xff]
    %v91 = vld [vmem:[%s4 + $0x10] sm:$0xf]
    %v92 = vld [vmem:[%s5] sm:$0x1]
    %v94 = vperm.slane %v92, 0
    %vm96 = vcmask 162816
    %v98 = vsel %vm96, %v88, 0
    %vm100 = vcmask 1043456
    %v102 = vsel %vm100, %v91, 0
    %104 = vmatpush.msra.mxu0 0.0
    %105 = vmatpush.msra.mxu0 0.0
    %106 = vmatpush.msra.mxu0 0.0
    %107 = vmatpush.msra.mxu0 0.0
    %108 = vmatpush.msra.mxu0 0.0
    %109 = vmatpush.msra.mxu0 0.0
    %110 = vmatpush.msra.mxu0 0.0
    %111 = vmatpush.msra.mxu0 0.0
    %112 = vmatpush.msra.mxu0 0.0
    %113 = vmatpush.msra.mxu0 0.0
    %114 = vmatpush.msra.mxu0 0.0
    %115 = vmatpush.msra.mxu0 0.0
    %116 = vmatpush.msra.mxu0 0.0
    %117 = vmatpush.msra.mxu0 %v102
    %118 = vmatpush.msra.mxu0 %v90
    %119 = vmatpush.msra.mxu0 %v89
    %120 = vmatmul.f32.gmra.mxu0 %v98
    %v121 = vpop.f32.mrf.mxu0
    %v122 = vadd.f32 %v94, %v121
    %123 = vdwg.mxu0
    %vm124 = vcmask 261120
    %125 = vst.msk [vmem:[#allocation8] sm:$0xff] %vm124, %v122
    %v126 = vld [vmem:[#allocation8] sm:$0x1]
    %s127 = sld [smem:[#allocation5]]
    %s128 = scalar_lea.vmem %s6, %s127
    %v129 = vld [vmem:[%s128] sm:$0x1]
    %v130 = vadd.f32 %v126, %v129
    %131 = vst.msk [vmem:[#allocation8] sm:$0x1] %vm58, %v130
    %v132 = vld [vmem:[#allocation8 + $0x1] sm:$0x1]
    %s133 = sld [smem:[#allocation5 + $0x1]]
    %s134 = scalar_lea.vmem %s6, %s133
    %v135 = vld [vmem:[%s134] sm:$0x1]
    %v136 = vadd.f32 %v132, %v135
    %137 = vst.msk [vmem:[#allocation8 + $0x1] sm:$0x1] %vm58, %v136
    %v138 = vld [vmem:[#allocation8 + $0x2] sm:$0x1]
    %s139 = sld [smem:[#allocation5 + $0x2]]
    %s140 = scalar_lea.vmem %s6, %s139
    %v141 = vld [vmem:[%s140] sm:$0x1]
    %v142 = vadd.f32 %v138, %v141
    %143 = vst.msk [vmem:[#allocation8 + $0x2] sm:$0x1] %vm58, %v142
    %v144 = vld [vmem:[#allocation8 + $0x3] sm:$0x1]
    %s145 = sld [smem:[#allocation5 + $0x3]]
    %s146 = scalar_lea.vmem %s6, %s145
    %v147 = vld [vmem:[%s146] sm:$0x1]
    %v148 = vadd.f32 %v144, %v147
    %149 = vst.msk [vmem:[#allocation8 + $0x3] sm:$0x1] %vm58, %v148
    %v150 = vld [vmem:[#allocation8 + $0x4] sm:$0x1]
    %s151 = sld [smem:[#allocation5 + $0x4]]
    %s152 = scalar_lea.vmem %s6, %s151
    %v153 = vld [vmem:[%s152] sm:$0x1]
    %v154 = vadd.f32 %v150, %v153
    %155 = vst.msk [vmem:[#allocation8 + $0x4] sm:$0x1] %vm58, %v154
    %v156 = vld [vmem:[#allocation8 + $0x5] sm:$0x1]
    %s157 = sld [smem:[#allocation5 + $0x5]]
    %s158 = scalar_lea.vmem %s6, %s157
    %v159 = vld [vmem:[%s158] sm:$0x1]
    %v160 = vadd.f32 %v156, %v159
    %161 = vst.msk [vmem:[#allocation8 + $0x5] sm:$0x1] %vm58, %v160
    %v162 = vld [vmem:[#allocation8 + $0x6] sm:$0x1]
    %s163 = sld [smem:[#allocation5 + $0x6]]
    %s164 = scalar_lea.vmem %s6, %s163
    %v165 = vld [vmem:[%s164] sm:$0x1]
    %v166 = vadd.f32 %v162, %v165
    %167 = vst.msk [vmem:[#allocation8 + $0x6] sm:$0x1] %vm58, %v166
    %v168 = vld [vmem:[#allocation8 + $0x7] sm:$0x1]
    %s169 = sld [smem:[#allocation5 + $0x7]]
    %s170 = scalar_lea.vmem %s6, %s169
    %v171 = vld [vmem:[%s170] sm:$0x1]
    %v172 = vadd.f32 %v168, %v171
    %173 = vst.msk [vmem:[#allocation8 + $0x7] sm:$0x1] %vm58, %v172
    // Predicated region
    $region38: #{tpu_custom_call.1} parent=1 // pred_check
      _
    $region39: #{tpu_custom_call.1} parent=1 // pred_check_branch
      %175 = sbr.rel (0) target = $region41
    $region40: #{tpu_custom_call.1} parent=1 // pred_region
      %177 = vsyncadd [#allocation3], 0
      %s179 = sshll.u32 [#allocation7], 4
      %s180 = int_to_ptr.vmem [resolvable:$true] %s179
      %s181 = sshll.u32 %s7, 4
      %s182 = int_to_ptr.hbm [resolvable:$true] %s181
      %184 = dma.vmem_to_hbm [thread:$0]  %s180, 128, %s182, [#allocation3]
    $region41: #{tpu_custom_call.1} parent=1 // pred_fallthru
      _
    // Predicated region
    $region42: #{tpu_custom_call.1} parent=1 // pred_check
      _
    $region43: #{tpu_custom_call.1} parent=1 // pred_check_branch
      %186 = sbr.rel (0) target = $region45
    $region44: #{tpu_custom_call.1} parent=1 // pred_region
      %188 = vsyncadd [#allocation9], 0
      %s190 = sshll.u32 [#allocation8], 4
      %s191 = int_to_ptr.vmem [resolvable:$true] %s190
      %s192 = sshll.u32 %s8, 4
      %s193 = int_to_ptr.hbm [resolvable:$true] %s192
      %195 = dma.vmem_to_hbm [thread:$0]  %s191, 128, %s193, [#allocation9]
    $region45: #{tpu_custom_call.1} parent=1 // pred_fallthru
      _
    // Predicated region
    $region46: #{tpu_custom_call.1} parent=1 // pred_check
      _
    $region47: #{tpu_custom_call.1} parent=1 // pred_check_branch
      %197 = sbr.rel (0) target = $region49
    $region48: #{tpu_custom_call.1} parent=1 // pred_region
      %199 = dma.done [#allocation3], 128
    $region49: #{tpu_custom_call.1} parent=1 // pred_fallthru
      _
    // Predicated region
    $region50: #{tpu_custom_call.1} parent=1 // pred_check
      _
    $region51: #{tpu_custom_call.1} parent=1 // pred_check_branch
      %201 = sbr.rel (0) target = $region53
    $region52: #{tpu_custom_call.1} parent=1 // pred_region
      %203 = dma.done [#allocation9], 128
    $region53: #{tpu_custom_call.1} parent=1 // pred_fallthru
      _
    %204 = vsyncpa [#allocation3], 1
    %205 = vsyncpa [#allocation9], 1
    %206 = vsyncpa [#allocation4], 1
    %207 = vsyncpa [#allocation6], 1

</llo_original>
